<compile_context>
chip_gen: v5e
topology: v5e:2x2
jax: 0.10.0
libtpu: 0.0.40
codegen_flags: <defaults>
</compile_context>

<pallas_src>
import jax
import jax.numpy as jnp
from jax.experimental import pallas as pl
from jax.experimental.pallas import tpu as pltpu


def net2_kernel(x_ref, w1_ref, b1_ref, w2_ref, b2_ref, w3_ref, b3_ref, o_ref):
    x = x_ref[...]          # [4, TB]   batch on the 128-lane axis
    w1 = w1_ref[...]        # [L1, 4]

    # Layer 1: K=4 contraction -> 4 broadcast FMAs on the VPU.  Each broadcast
    # is single-use, so nothing is re-materialised across k.
    # TODO(synk): switch to jnp.dot(w1, x) if profiling shows the VALU slot
    #             saturating after the memory/overhead fixes (review item).
    h1 = b1_ref[...] + w1[:, 0:1] * x[0:1, :]
    for k in range(1, 4):
        h1 = h1 + w1[:, k:k + 1] * x[k:k + 1, :]
    h1 = jnp.maximum(h1, 0.0)                                     # [L1, TB]

    # Layers 2 & 3: K=L1/L2, N=TB -> MXU matmuls with f32 accumulation.
    h2 = jnp.dot(w2_ref[...], h1, preferred_element_type=jnp.float32)
    h2 = jnp.maximum(h2 + b2_ref[...], 0.0)                       # [L2, TB]

    out = jnp.dot(w3_ref[...], h2, preferred_element_type=jnp.float32)
    o_ref[...] = (out + b3_ref[...]).astype(o_ref.dtype)          # [1, TB]


def _round_up(n, m):
    return ((n + m - 1) // m) * m


def _net2_call(xt, params, tb):
    """xt: [4, B] feature-major float32.  Returns [1, B] float32."""
    w1, b1 = params["w1"], params["b1"]   # [L1, 4],  [L1, 1]
    w2, b2 = params["w2"], params["b2"]   # [L2, L1], [L2, 1]
    w3, b3 = params["w3"], params["b3"]   # [1, L2],  [1, 1]

    B = xt.shape[1]

    # Batch tile: multiple of 128 lanes (hard requirement), large by default
    # to amortise the per-grid-step pipeline overhead, capped so the parallel
    # grid keeps >= 2 steps whenever B allows it (v7x has 2 TCs per chip).
    tb = max(128, _round_up(int(tb), 128))
    two_step_cap = max(128, _round_up(-(-B // 2), 128))   # ceil(B/2) -> x128
    TB = min(tb, two_step_cap)
    grid = (pl.cdiv(B, TB),)   # last block may be partial: Pallas clips it

    resident = lambda shape: pl.BlockSpec(shape, lambda i: (0, 0))  # VMEM-resident

    return pl.pallas_call(
        net2_kernel,
        out_shape=jax.ShapeDtypeStruct((1, B), jnp.float32),
        grid=grid,
        in_specs=[
            pl.BlockSpec((4, TB), lambda i: (0, i)),        # streamed batch tile
            resident(w1.shape), resident(b1.shape),
            resident(w2.shape), resident(b2.shape),
            resident(w3.shape), resident(b3.shape),
        ],
        out_specs=pl.BlockSpec((1, TB), lambda i: (0, i)),  # lane-dense output
        compiler_params=pltpu.CompilerParams(
            dimension_semantics=("parallel",),              # v7x: 2 TCs share grid
            vmem_limit_bytes=48 * 1024 * 1024,              # v5e default is 16 MiB
        ),
    )(xt, w1, b1, w2, b2, w3, b3)


def net2_forward(x, params, tb=8192, feature_major=False):
    """Net2 forward pass.

    x: [B, 4] (torch layout) or, with feature_major=True, [4, B] — the latter
    skips the single remaining wrapper-side relayout pass entirely.
    Returns [B, 1] float32, matching the PyTorch module.
    """
    xt = x if feature_major else x.T       # [4, B]  batch on lanes
    B = xt.shape[1]
    out = _net2_call(xt, params, tb)       # [1, B]
    return out.reshape(B, 1)               # free: identical row-major order


def init_params(key, l1, l2):
    """torch.nn.Linear default init (U[-1/sqrt(fan_in), +1/sqrt(fan_in)]).

    Weights kept in torch layout [out, in]; biases stored as [out, 1] columns."""
    ks = jax.random.split(key, 6)

    def lin(kw, kb, fan_in, fan_out):
        bound = 1.0 / jnp.sqrt(jnp.float32(fan_in))
        w = jax.random.uniform(kw, (fan_out, fan_in), jnp.float32, -bound, bound)
        b = jax.random.uniform(kb, (fan_out, 1), jnp.float32, -bound, bound)
        return w, b

    w1, b1 = lin(ks[0], ks[1], 4, l1)
    w2, b2 = lin(ks[2], ks[3], l1, l2)
    w3, b3 = lin(ks[4], ks[5], l2, 1)
    return {"w1": w1, "b1": b1, "w2": w2, "b2": b2, "w3": w3, "b3": b3}


def net2_reference(x, p):
    h1 = jnp.maximum(x @ p["w1"].T + p["b1"].T, 0.0)
    h2 = jnp.maximum(h1 @ p["w2"].T + p["b2"].T, 0.0)
    return h2 @ p["w3"].T + p["b3"].T


if __name__ == "__main__":
    key = jax.random.PRNGKey(0)
    k_x, k_p = jax.random.split(key)

    # B deliberately not a multiple of 128: exercises Pallas partial-block
    # clipping on both input reads and output writes (no jnp.pad pass).
    B, L1, L2 = 1000, 32, 32
    x = jax.random.normal(k_x, (B, 4), jnp.float32)
    params = init_params(k_p, L1, L2)

    # Default tb=8192 is capped to 512 here -> 2 parallel grid steps.
    out = net2_forward(x, params)
    out = jax.block_until_ready(out)

    ref = net2_reference(x, params)
    assert out.shape == (B, 1), out.shape
    assert jnp.allclose(out, ref, atol=1e-5, rtol=1e-5), "mismatch vs reference"

    # Feature-major input path: zero wrapper-side relayout passes.
    out_fm = net2_forward(x.T, params, feature_major=True)
    out_fm = jax.block_until_ready(out_fm)
    assert out_fm.shape == (B, 1), out_fm.shape
    assert jnp.allclose(out_fm, ref, atol=1e-5, rtol=1e-5), "fm path mismatch"

    print("KERNEL_OK")
</pallas_src>

<mosaic_0001>
module attributes {stable_mosaic.version = 11 : i64} {
  func.func @net2_kernel(%arg0: i32, %arg1: memref<4x512xf32, #tpu.memory_space<vmem>>, %arg2: memref<32x4xf32, #tpu.memory_space<vmem>>, %arg3: memref<32x1xf32, #tpu.memory_space<vmem>>, %arg4: memref<32x32xf32, #tpu.memory_space<vmem>>, %arg5: memref<32x1xf32, #tpu.memory_space<vmem>>, %arg6: memref<1x32xf32, #tpu.memory_space<vmem>>, %arg7: memref<1x1xf32, #tpu.memory_space<vmem>>, %arg8: memref<1x512xf32, #tpu.memory_space<vmem>>) attributes {dimension_semantics = [#tpu.dimension_semantics<parallel>], iteration_bounds = array<i64: 2>, scalar_prefetch = 0 : i64, scratch_operands = 0 : i64, tpu.core_type = #tpu.core_type<tc>, window_params = [{transform_indices = @transform_0, window_bounds = array<i64: 4, 512>}, {pipeline_mode = #tpu.pipeline_mode<synchronous>, transform_indices = @transform_1, window_bounds = array<i64: 32, 4>}, {pipeline_mode = #tpu.pipeline_mode<synchronous>, transform_indices = @transform_2, window_bounds = array<i64: 32, 1>}, {pipeline_mode = #tpu.pipeline_mode<synchronous>, transform_indices = @transform_3, window_bounds = array<i64: 32, 32>}, {pipeline_mode = #tpu.pipeline_mode<synchronous>, transform_indices = @transform_4, window_bounds = array<i64: 32, 1>}, {pipeline_mode = #tpu.pipeline_mode<synchronous>, transform_indices = @transform_5, window_bounds = array<i64: 1, 32>}, {pipeline_mode = #tpu.pipeline_mode<synchronous>, transform_indices = @transform_6, window_bounds = array<i64: 1, 1>}, {transform_indices = @transform_7, window_bounds = array<i64: 1, 512>}]} {
    %c0 = arith.constant 0 : index
    %c0_0 = arith.constant 0 : index
    %0 = vector.load %arg1[%c0, %c0_0] : memref<4x512xf32, #tpu.memory_space<vmem>>, vector<4x512xf32>
    %c0_1 = arith.constant 0 : index
    %c0_2 = arith.constant 0 : index
    %1 = vector.load %arg2[%c0_1, %c0_2] : memref<32x4xf32, #tpu.memory_space<vmem>>, vector<32x4xf32>
    %c0_3 = arith.constant 0 : index
    %c0_4 = arith.constant 0 : index
    %2 = vector.load %arg3[%c0_3, %c0_4] : memref<32x1xf32, #tpu.memory_space<vmem>>, vector<32x1xf32>
    %3 = vector.extract_strided_slice %1 {offsets = [0, 0], sizes = [32, 1], strides = [1, 1]} : vector<32x4xf32> to vector<32x1xf32>
    %4 = vector.extract_strided_slice %0 {offsets = [0, 0], sizes = [1, 512], strides = [1, 1]} : vector<4x512xf32> to vector<1x512xf32>
    %5 = vector.broadcast %3 : vector<32x1xf32> to vector<32x512xf32>
    %6 = vector.broadcast %4 : vector<1x512xf32> to vector<32x512xf32>
    %7 = arith.mulf %5, %6 : vector<32x512xf32>
    %8 = vector.broadcast %2 : vector<32x1xf32> to vector<32x512xf32>
    %9 = arith.addf %8, %7 : vector<32x512xf32>
    %10 = vector.extract_strided_slice %1 {offsets = [0, 1], sizes = [32, 1], strides = [1, 1]} : vector<32x4xf32> to vector<32x1xf32>
    %11 = vector.extract_strided_slice %0 {offsets = [1, 0], sizes = [1, 512], strides = [1, 1]} : vector<4x512xf32> to vector<1x512xf32>
    %12 = vector.broadcast %10 : vector<32x1xf32> to vector<32x512xf32>
    %13 = vector.broadcast %11 : vector<1x512xf32> to vector<32x512xf32>
    %14 = arith.mulf %12, %13 : vector<32x512xf32>
    %15 = arith.addf %9, %14 : vector<32x512xf32>
    %16 = vector.extract_strided_slice %1 {offsets = [0, 2], sizes = [32, 1], strides = [1, 1]} : vector<32x4xf32> to vector<32x1xf32>
    %17 = vector.extract_strided_slice %0 {offsets = [2, 0], sizes = [1, 512], strides = [1, 1]} : vector<4x512xf32> to vector<1x512xf32>
    %18 = vector.broadcast %16 : vector<32x1xf32> to vector<32x512xf32>
    %19 = vector.broadcast %17 : vector<1x512xf32> to vector<32x512xf32>
    %20 = arith.mulf %18, %19 : vector<32x512xf32>
    %21 = arith.addf %15, %20 : vector<32x512xf32>
    %22 = vector.extract_strided_slice %1 {offsets = [0, 3], sizes = [32, 1], strides = [1, 1]} : vector<32x4xf32> to vector<32x1xf32>
    %23 = vector.extract_strided_slice %0 {offsets = [3, 0], sizes = [1, 512], strides = [1, 1]} : vector<4x512xf32> to vector<1x512xf32>
    %24 = vector.broadcast %22 : vector<32x1xf32> to vector<32x512xf32>
    %25 = vector.broadcast %23 : vector<1x512xf32> to vector<32x512xf32>
    %26 = arith.mulf %24, %25 : vector<32x512xf32>
    %27 = arith.addf %21, %26 : vector<32x512xf32>
    %cst = arith.constant 0.000000e+00 : f32
    %28 = vector.broadcast %cst : f32 to vector<32x512xf32>
    %29 = arith.maximumf %27, %28 : vector<32x512xf32>
    %c0_5 = arith.constant 0 : index
    %c0_6 = arith.constant 0 : index
    %30 = vector.load %arg4[%c0_5, %c0_6] : memref<32x32xf32, #tpu.memory_space<vmem>>, vector<32x32xf32>
    %cst_7 = arith.constant dense<0.000000e+00> : vector<32x512xf32>
    %31 = tpu.matmul %30, %29, %cst_7 {dimension_numbers = #tpu.dot_dimension_numbers<[1], [0], [0], [1], [0, 0, 1, 1], [], []>} : vector<32x32xf32>, vector<32x512xf32>, vector<32x512xf32> -> vector<32x512xf32>
    %c0_8 = arith.constant 0 : index
    %c0_9 = arith.constant 0 : index
    %32 = vector.load %arg5[%c0_8, %c0_9] : memref<32x1xf32, #tpu.memory_space<vmem>>, vector<32x1xf32>
    %33 = vector.broadcast %32 : vector<32x1xf32> to vector<32x512xf32>
    %34 = arith.addf %31, %33 : vector<32x512xf32>
    %cst_10 = arith.constant 0.000000e+00 : f32
    %35 = vector.broadcast %cst_10 : f32 to vector<32x512xf32>
    %36 = arith.maximumf %34, %35 : vector<32x512xf32>
    %c0_11 = arith.constant 0 : index
    %c0_12 = arith.constant 0 : index
    %37 = vector.load %arg6[%c0_11, %c0_12] : memref<1x32xf32, #tpu.memory_space<vmem>>, vector<1x32xf32>
    %cst_13 = arith.constant dense<0.000000e+00> : vector<1x512xf32>
    %38 = tpu.matmul %37, %36, %cst_13 {dimension_numbers = #tpu.dot_dimension_numbers<[1], [0], [0], [1], [0, 0, 1, 1], [], []>} : vector<1x32xf32>, vector<32x512xf32>, vector<1x512xf32> -> vector<1x512xf32>
    %c0_14 = arith.constant 0 : index
    %c0_15 = arith.constant 0 : index
    %39 = vector.load %arg7[%c0_14, %c0_15] : memref<1x1xf32, #tpu.memory_space<vmem>>, vector<1x1xf32>
    %40 = vector.broadcast %39 : vector<1x1xf32> to vector<1x512xf32>
    %41 = arith.addf %38, %40 : vector<1x512xf32>
    %c0_16 = arith.constant 0 : index
    %c0_17 = arith.constant 0 : index
    %42 = vector.load %arg8[%c0_16, %c0_17] : memref<1x512xf32, #tpu.memory_space<vmem>>, vector<1x512xf32>
    tpu.vector_store %arg8[%c0_16, %c0_17], %41 {strides = array<i32>} : memref<1x512xf32, #tpu.memory_space<vmem>>, vector<1x512xf32>,
    return
  }
  func.func @transform_0(%arg0: i32) -> (i32, i32) {
    %c0_i32 = arith.constant 0 : i32
    %c0_i32_0 = arith.constant 0 : i32
    return %c0_i32, %arg0 : i32, i32
  }
  func.func @transform_1(%arg0: i32) -> (i32, i32) {
    %c0_i32 = arith.constant 0 : i32
    %c0_i32_0 = arith.constant 0 : i32
    %c0_i32_1 = arith.constant 0 : i32
    return %c0_i32, %c0_i32_0 : i32, i32
  }
  func.func @transform_2(%arg0: i32) -> (i32, i32) {
    %c0_i32 = arith.constant 0 : i32
    %c0_i32_0 = arith.constant 0 : i32
    %c0_i32_1 = arith.constant 0 : i32
    return %c0_i32, %c0_i32_0 : i32, i32
  }
  func.func @transform_3(%arg0: i32) -> (i32, i32) {
    %c0_i32 = arith.constant 0 : i32
    %c0_i32_0 = arith.constant 0 : i32
    %c0_i32_1 = arith.constant 0 : i32
    return %c0_i32, %c0_i32_0 : i32, i32
  }
  func.func @transform_4(%arg0: i32) -> (i32, i32) {
    %c0_i32 = arith.constant 0 : i32
    %c0_i32_0 = arith.constant 0 : i32
    %c0_i32_1 = arith.constant 0 : i32
    return %c0_i32, %c0_i32_0 : i32, i32
  }
  func.func @transform_5(%arg0: i32) -> (i32, i32) {
    %c0_i32 = arith.constant 0 : i32
    %c0_i32_0 = arith.constant 0 : i32
    %c0_i32_1 = arith.constant 0 : i32
    return %c0_i32, %c0_i32_0 : i32, i32
  }
  func.func @transform_6(%arg0: i32) -> (i32, i32) {
    %c0_i32 = arith.constant 0 : i32
    %c0_i32_0 = arith.constant 0 : i32
    %c0_i32_1 = arith.constant 0 : i32
    return %c0_i32, %c0_i32_0 : i32, i32
  }
  func.func @transform_7(%arg0: i32) -> (i32, i32) {
    %c0_i32 = arith.constant 0 : i32
    %c0_i32_0 = arith.constant 0 : i32
    return %c0_i32, %arg0 : i32, i32
  }
}

</mosaic_0001>

<llo_original>
// kernel: tpu_custom_call.1
$region0: #{tpu_custom_call.1}
  #allocation0 [shape = 'u32[]', space=smem, size = 0x4, offset = 0x4, fixed_abs, tag = 'smem constant byte address 0x4 - core index']
  #allocation1 [shape = 'u32[72,128]{1,0:T(1,128)}', space=vmem, size = 0x9000, scoped, tag = 'internal scratch']
  #allocation2 [shape = 'f32[1,1]{1,0:T(1,128)S(1)}', space=vmem, size = 0x200, scoped, tag = 'scoped memory for tpu_custom_call.1']
  %s0 = inlined_call_operand.vmem [shape: f32[4,1000], index: 0, kind: input, shape index: {}]
  %s1 = inlined_call_operand.vmem [shape: f32[32,4], index: 1, kind: input, shape index: {}]
  %s2 = inlined_call_operand.vmem [shape: f32[32,1], index: 2, kind: input, shape index: {}]
  %s3 = inlined_call_operand.vmem [shape: f32[32,32], index: 3, kind: input, shape index: {}]
  %s4 = inlined_call_operand.vmem [shape: f32[32,1], index: 4, kind: input, shape index: {}]
  %s5 = inlined_call_operand.vmem [shape: f32[1,32], index: 5, kind: input, shape index: {}]
  %s6 = inlined_call_operand.<no memory space> [shape: f32[1,1], index: 6, kind: input, shape index: {}]
  %s7 = inlined_call_operand.hbm [shape: f32[1,1000], index: 7, kind: output, shape index: {}]
  %s8 = sld [smem:[#allocation0]]
  $region61: #{tpu_custom_call.1} parent=0
    _
  %s10 = ssub.s32 1, %s8
  %s11 = scalar_select 0, %s10, %s8
  %v12 = vstv %s6
  %13 = vst [vmem:[#allocation2] sm:$0x1] %v12
  $region1: #{tpu_custom_call.1} parent=0
    #allocation3 [shape = 'u8[4096]{0}', space=vmem, size = 0x1000, scoped, tag = 'output window, operand 0']
    #allocation4 [shape = 's32[2]{0}', space=sflag, size = 0x8, scoped, tag = 'scoped memory for tpu_custom_call.1']
    %14 = vsyncpa [#allocation4], 0
    %s15 = scalar_lea.sflag [#allocation4], 1
    %16 = vsyncpa %s15, 0
    loop: start=0, step=1, limit=4
    $region2: #{tpu_custom_call.1} parent=1 // loop_pre_header
      _
    $region3: #{tpu_custom_call.1} parent=1 // loop_header
      %s18 = sphi 0, %s22
      %p19 = scmp.ge.s32.totalorder %s18, 4
      %s28 = sphi 0, %s30
      %s31 = sphi 0, %s28
      %s32 = sphi 0, %s31
      %s48 = sphi 0, %s32
      %s52 = sphi 0, %s52
      %s54 = sphi 0, %s52
      %s55 = sphi 0, %s54
      %s69 = sphi 0, %s55
      %s73 = sphi 0, %s73
      %s75 = sphi 0, %s73
      %s76 = sphi 0, %s75
      %s90 = sphi 0, %s76
      %s94 = sphi 0, %s94
      %s96 = sphi 0, %s94
      %s97 = sphi 0, %s96
      %s111 = sphi 0, %s97
      %s115 = sphi 0, %s115
      %s117 = sphi 0, %s115
      %s118 = sphi 0, %s117
      %s132 = sphi 0, %s118
      %s136 = sphi 0, %s136
      %s138 = sphi 0, %s136
      %s139 = sphi 0, %s138
      %s153 = sphi 0, %s139
      %s157 = sphi 0, %s157
      %s159 = sphi 0, %s157
      %s160 = sphi 0, %s159
      %s174 = sphi 0, %s160
      %s180 = sphi 0, %s182
      %s183 = sphi 0, %s180
      %s184 = sphi 0, %s183
      %s200 = sphi 0, %s184
    $region4: #{tpu_custom_call.1} parent=1 // loop_header_branch
      %21 = sbr.rel (%p19) target = $region8
    $region5: #{tpu_custom_call.1} parent=1 // loop_body
      %s23 = ssub.s32 %s18, 1
      %s24 = ssub.s32 %s18, 2
      %s25 = sadd.s32 %s18, 1
      %s26 = ssub.s32 %s18, %s25
      %p27 = scmp.eq.s32.totalorder %s26, 0
      %s29 = sadd.s32 %s28, 1
      %s30 = scalar_select %p27, %s28, %s29
      %p33 = pneg %p27
      %p34 = scmp.eq.s32.totalorder %s18, 1
      %p35 = por %p33, %p34
      %p36 = scmp.ne.s32.totalorder %s28, %s31
      %p37 = scmp.eq.s32.totalorder %s18, 0
      %p38 = por %p36, %p37
      %p39 = scmp.ne.s32.totalorder %s28, %s31
      %p40 = scmp.eq.s32.totalorder %s23, 1
      %p41 = por %p39, %p40
      %p42 = scmp.ne.s32.totalorder %s31, %s32
      %p43 = scmp.eq.s32.totalorder %s23, 0
      %p44 = por %p42, %p43
      %p45 = scmp.ne.s32.totalorder %s31, %s32
      %p46 = scmp.eq.s32.totalorder %s24, 1
      %p47 = por %p45, %p46
      %p49 = scmp.ne.s32.totalorder %s32, %s48
      %p50 = scmp.eq.s32.totalorder %s24, 0
      %p51 = por %p49, %p50
      %s53 = sadd.s32 %s52, 1
      %p56 = scmp.eq.s32.totalorder %s18, 1
      %p57 = scmp.ne.s32.totalorder %s52, %s54
      %p58 = scmp.eq.s32.totalorder %s18, 0
      %p59 = por %p57, %p58
      %p60 = scmp.ne.s32.totalorder %s52, %s54
      %p61 = scmp.eq.s32.totalorder %s23, 1
      %p62 = por %p60, %p61
      %p63 = scmp.ne.s32.totalorder %s54, %s55
      %p64 = scmp.eq.s32.totalorder %s23, 0
      %p65 = por %p63, %p64
      %p66 = scmp.ne.s32.totalorder %s54, %s55
      %p67 = scmp.eq.s32.totalorder %s24, 1
      %p68 = por %p66, %p67
      %p70 = scmp.ne.s32.totalorder %s55, %s69
      %p71 = scmp.eq.s32.totalorder %s24, 0
      %p72 = por %p70, %p71
      %s74 = sadd.s32 %s73, 1
      %p77 = scmp.eq.s32.totalorder %s18, 1
      %p78 = scmp.ne.s32.totalorder %s73, %s75
      %p79 = scmp.eq.s32.totalorder %s18, 0
      %p80 = por %p78, %p79
      %p81 = scmp.ne.s32.totalorder %s73, %s75
      %p82 = scmp.eq.s32.totalorder %s23, 1
      %p83 = por %p81, %p82
      %p84 = scmp.ne.s32.totalorder %s75, %s76
      %p85 = scmp.eq.s32.totalorder %s23, 0
      %p86 = por %p84, %p85
      %p87 = scmp.ne.s32.totalorder %s75, %s76
      %p88 = scmp.eq.s32.totalorder %s24, 1
      %p89 = por %p87, %p88
      %p91 = scmp.ne.s32.totalorder %s76, %s90
      %p92 = scmp.eq.s32.totalorder %s24, 0
      %p93 = por %p91, %p92
      %s95 = sadd.s32 %s94, 1
      %p98 = scmp.eq.s32.totalorder %s18, 1
      %p99 = scmp.ne.s32.totalorder %s94, %s96
      %p100 = scmp.eq.s32.totalorder %s18, 0
      %p101 = por %p99, %p100
      %p102 = scmp.ne.s32.totalorder %s94, %s96
      %p103 = scmp.eq.s32.totalorder %s23, 1
      %p104 = por %p102, %p103
      %p105 = scmp.ne.s32.totalorder %s96, %s97
      %p106 = scmp.eq.s32.totalorder %s23, 0
      %p107 = por %p105, %p106
      %p108 = scmp.ne.s32.totalorder %s96, %s97
      %p109 = scmp.eq.s32.totalorder %s24, 1
      %p110 = por %p108, %p109
      %p112 = scmp.ne.s32.totalorder %s97, %s111
      %p113 = scmp.eq.s32.totalorder %s24, 0
      %p114 = por %p112, %p113
      %s116 = sadd.s32 %s115, 1
      %p119 = scmp.eq.s32.totalorder %s18, 1
      %p120 = scmp.ne.s32.totalorder %s115, %s117
      %p121 = scmp.eq.s32.totalorder %s18, 0
      %p122 = por %p120, %p121
      %p123 = scmp.ne.s32.totalorder %s115, %s117
      %p124 = scmp.eq.s32.totalorder %s23, 1
      %p125 = por %p123, %p124
      %p126 = scmp.ne.s32.totalorder %s117, %s118
      %p127 = scmp.eq.s32.totalorder %s23, 0
      %p128 = por %p126, %p127
      %p129 = scmp.ne.s32.totalorder %s117, %s118
      %p130 = scmp.eq.s32.totalorder %s24, 1
      %p131 = por %p129, %p130
      %p133 = scmp.ne.s32.totalorder %s118, %s132
      %p134 = scmp.eq.s32.totalorder %s24, 0
      %p135 = por %p133, %p134
      %s137 = sadd.s32 %s136, 1
      %p140 = scmp.eq.s32.totalorder %s18, 1
      %p141 = scmp.ne.s32.totalorder %s136, %s138
      %p142 = scmp.eq.s32.totalorder %s18, 0
      %p143 = por %p141, %p142
      %p144 = scmp.ne.s32.totalorder %s136, %s138
      %p145 = scmp.eq.s32.totalorder %s23, 1
      %p146 = por %p144, %p145
      %p147 = scmp.ne.s32.totalorder %s138, %s139
      %p148 = scmp.eq.s32.totalorder %s23, 0
      %p149 = por %p147, %p148
      %p150 = scmp.ne.s32.totalorder %s138, %s139
      %p151 = scmp.eq.s32.totalorder %s24, 1
      %p152 = por %p150, %p151
      %p154 = scmp.ne.s32.totalorder %s139, %s153
      %p155 = scmp.eq.s32.totalorder %s24, 0
      %p156 = por %p154, %p155
      %s158 = sadd.s32 %s157, 1
      %p161 = scmp.eq.s32.totalorder %s18, 1
      %p162 = scmp.ne.s32.totalorder %s157, %s159
      %p163 = scmp.eq.s32.totalorder %s18, 0
      %p164 = por %p162, %p163
      %p165 = scmp.ne.s32.totalorder %s157, %s159
      %p166 = scmp.eq.s32.totalorder %s23, 1
      %p167 = por %p165, %p166
      %p168 = scmp.ne.s32.totalorder %s159, %s160
      %p169 = scmp.eq.s32.totalorder %s23, 0
      %p170 = por %p168, %p169
      %p171 = scmp.ne.s32.totalorder %s159, %s160
      %p172 = scmp.eq.s32.totalorder %s24, 1
      %p173 = por %p171, %p172
      %p175 = scmp.ne.s32.totalorder %s160, %s174
      %p176 = scmp.eq.s32.totalorder %s24, 0
      %p177 = por %p175, %p176
      %s178 = ssub.s32 %s18, %s25
      %p179 = scmp.eq.s32.totalorder %s178, 0
      %s181 = sadd.s32 %s180, 1
      %s182 = scalar_select %p179, %s180, %s181
      %p185 = pneg %p179
      %p186 = scmp.eq.s32.totalorder %s18, 1
      %p187 = por %p185, %p186
      %p188 = scmp.ne.s32.totalorder %s180, %s183
      %p189 = scmp.eq.s32.totalorder %s18, 0
      %p190 = por %p188, %p189
      %p191 = scmp.ne.s32.totalorder %s180, %s183
      %p192 = scmp.eq.s32.totalorder %s23, 1
      %p193 = por %p191, %p192
      %p194 = scmp.ne.s32.totalorder %s183, %s184
      %p195 = scmp.eq.s32.totalorder %s23, 0
      %p196 = por %p194, %p195
      %p197 = scmp.ne.s32.totalorder %s183, %s184
      %p198 = scmp.eq.s32.totalorder %s24, 1
      %p199 = por %p197, %p198
      %p201 = scmp.ne.s32.totalorder %s184, %s200
      %p202 = scmp.eq.s32.totalorder %s24, 0
      %p203 = por %p201, %p202
      %p204 = scmp.le.s32.totalorder 1, %s18
      %p205 = scmp.lt.s32.totalorder %s18, 3
      %p206 = pnand %p204, %p205
      %p207 = pneg %p206
      // Predicated region
      $region9: #{tpu_custom_call.1} parent=5 // pred_check
        _
      $region10: #{tpu_custom_call.1} parent=5 // pred_check_branch
        %209 = sbr.rel (%p206) target = $region12
      $region11: #{tpu_custom_call.1} parent=5 // pred_region
        %s210 = ssub.s32 %s18, 1
        // Predicated region
        $region13: #{tpu_custom_call.1} parent=11 // pred_check
          %p211 = pneg %p65
        $region14: #{tpu_custom_call.1} parent=11 // pred_check_branch
          %213 = sbr.rel (%p211) target = $region16
        $region15: #{tpu_custom_call.1} parent=11 // pred_region
          _
        $region16: #{tpu_custom_call.1} parent=11 // pred_fallthru
          _
        // Predicated region
        $region17: #{tpu_custom_call.1} parent=11 // pred_check
          %p214 = pneg %p86
        $region18: #{tpu_custom_call.1} parent=11 // pred_check_branch
          %216 = sbr.rel (%p214) target = $region20
        $region19: #{tpu_custom_call.1} parent=11 // pred_region
          _
        $region20: #{tpu_custom_call.1} parent=11 // pred_fallthru
          _
        // Predicated region
        $region21: #{tpu_custom_call.1} parent=11 // pred_check
          %p217 = pneg %p107
        $region22: #{tpu_custom_call.1} parent=11 // pred_check_branch
          %219 = sbr.rel (%p217) target = $region24
        $region23: #{tpu_custom_call.1} parent=11 // pred_region
          _
        $region24: #{tpu_custom_call.1} parent=11 // pred_fallthru
          _
        // Predicated region
        $region25: #{tpu_custom_call.1} parent=11 // pred_check
          %p220 = pneg %p128
        $region26: #{tpu_custom_call.1} parent=11 // pred_check_branch
          %222 = sbr.rel (%p220) target = $region28
        $region27: #{tpu_custom_call.1} parent=11 // pred_region
          _
        $region28: #{tpu_custom_call.1} parent=11 // pred_fallthru
          _
        // Predicated region
        $region29: #{tpu_custom_call.1} parent=11 // pred_check
          %p223 = pneg %p149
        $region30: #{tpu_custom_call.1} parent=11 // pred_check_branch
          %225 = sbr.rel (%p223) target = $region32
        $region31: #{tpu_custom_call.1} parent=11 // pred_region
          _
        $region32: #{tpu_custom_call.1} parent=11 // pred_fallthru
          _
        // Predicated region
        $region33: #{tpu_custom_call.1} parent=11 // pred_check
          %p226 = pneg %p170
        $region34: #{tpu_custom_call.1} parent=11 // pred_check_branch
          %228 = sbr.rel (%p226) target = $region36
        $region35: #{tpu_custom_call.1} parent=11 // pred_region
          _
        $region36: #{tpu_custom_call.1} parent=11 // pred_fallthru
          _
      $region12: #{tpu_custom_call.1} parent=5 // pred_fallthru
        _
      %p229 = scmp.lt.s32.totalorder %s18, 2
      // Predicated region
      $region37: #{tpu_custom_call.1} parent=5 // pred_check
        %p230 = pneg %p229
      $region38: #{tpu_custom_call.1} parent=5 // pred_check_branch
        %232 = sbr.rel (%p230) target = $region40
      $region39: #{tpu_custom_call.1} parent=5 // pred_region
        // Predicated region
        $region41: #{tpu_custom_call.1} parent=39 // pred_check
          %p233 = pneg %p38
        $region42: #{tpu_custom_call.1} parent=39 // pred_check_branch
          %235 = sbr.rel (%p233) target = $region44
        $region43: #{tpu_custom_call.1} parent=39 // pred_region
          %s236 = smul.u32 4, %s18
          %p237 = scmp.lt.s32.totalorder %s236, 7
          %s238 = scalar_select %p237, %s236, 7
          %s239 = smul.addr %s238, 4
          %s240 = scalar_lea.vmem %s0, %s239
          %s241 = smul.u32 4, %s18
        $region44: #{tpu_custom_call.1} parent=39 // pred_fallthru
          _
      $region40: #{tpu_custom_call.1} parent=5 // pred_fallthru
        _
      %p242 = scmp.le.s32.totalorder 1, %s18
      %p243 = scmp.lt.s32.totalorder %s18, 3
      %p244 = pnand %p242, %p243
      %p245 = pneg %p244
      // Predicated region
      $region45: #{tpu_custom_call.1} parent=5 // pred_check
        _
      $region46: #{tpu_custom_call.1} parent=5 // pred_check_branch
        %247 = sbr.rel (%p244) target = $region48
      $region47: #{tpu_custom_call.1} parent=5 // pred_region
        %s248 = ssub.s32 %s18, 1
        %s249 = smul.u32 4, %s23
        %p250 = scmp.lt.s32.totalorder %s249, 7
        %s251 = scalar_select %p250, %s249, 7
        %s252 = smul.addr %s251, 4
        %s253 = scalar_lea.vmem %s0, %s252
        %p254 = pneg %p44
        %p255 = pneg %p41
        %p256 = pneg %p65
        %p257 = pneg %p62
        %p258 = pneg %p86
        %p259 = pneg %p83
        %p260 = pneg %p107
        %p261 = pneg %p104
        %p262 = pneg %p128
        %p263 = pneg %p125
        %p264 = pneg %p149
        %p265 = pneg %p146
        %p266 = pneg %p170
        %p267 = pneg %p167
        %p268 = pneg %p196
        %p269 = pneg %p193
        %s270 = sand.u32 %s183, 1
        %s271 = scalar_lea.sflag [#allocation4], %s270
        %s272 = sand.u32 %s183, 1
        %s273 = smul.addr %s272, 4
        %s274 = scalar_lea.vmem [#allocation3], %s273
        %s275 = smul.u32 4, %s23
        %p276 = scmp.lt.s32.totalorder %s275, 7
        %s277 = scalar_select %p276, %s275, 7
        %s278 = smul.addr %s277, 4
        %s279 = scalar_lea.vmem %s0, %s278
        %s280 = smul.u32 4, %s23
        %s281 = smul.u32 4, %s23
        %v282 = vld [vmem:[%s279] sm:$0xff]
        %v283 = vld [vmem:[%s279 + $0x8] sm:$0xff]
        %v284 = vld [vmem:[%s1] sm:$0xff]
        %v285 = vld [vmem:[%s1 + $0x8] sm:$0xff]
        %v286 = vld [vmem:[%s1 + $0x10] sm:$0xff]
        %v287 = vld [vmem:[%s1 + $0x18] sm:$0xff]
        %v288 = vld [vmem:[%s2] sm:$0xff]
        %v289 = vld [vmem:[%s2 + $0x8] sm:$0xff]
        %v290 = vld [vmem:[%s2 + $0x10] sm:$0xff]
        %v291 = vld [vmem:[%s2 + $0x18] sm:$0xff]
        %293 = vset.pattern.permute.xlu0 0
        %294 = vperm.xlu0 %293, %v284
        %v295 = vpop.permute.xlu0 %294
        %298 = vset.pattern.permute.xlu0 0
        %299 = vperm.xlu0 %298, %v285
        %v300 = vpop.permute.xlu0 %299
        %303 = vset.pattern.permute.xlu0 0
        %304 = vperm.xlu0 %303, %v286
        %v305 = vpop.permute.xlu0 %304
        %308 = vset.pattern.permute.xlu0 0
        %309 = vperm.xlu0 %308, %v287
        %v310 = vpop.permute.xlu0 %309
        %v314 = vperm.slane %v282, 0
        %v315 = vperm.slane %v282, 4
        %v316 = vperm.slane %v283, 0
        %v317 = vperm.slane %v283, 4
        %v322 = vperm.slane %v314, 0
        %v323 = vperm.slane %v315, 0
        %v324 = vperm.slane %v316, 0
        %v325 = vperm.slane %v317, 0
        %v326 = vmul.f32 %v295, %v322
        %v327 = vmul.f32 %v295, %v323
        %v328 = vmul.f32 %v295, %v324
        %v329 = vmul.f32 %v295, %v325
        %v330 = vmul.f32 %v300, %v322
        %v331 = vmul.f32 %v300, %v323
        %v332 = vmul.f32 %v300, %v324
        %v333 = vmul.f32 %v300, %v325
        %v334 = vmul.f32 %v305, %v322
        %v335 = vmul.f32 %v305, %v323
        %v336 = vmul.f32 %v305, %v324
        %v337 = vmul.f32 %v305, %v325
        %v338 = vmul.f32 %v310, %v322
        %v339 = vmul.f32 %v310, %v323
        %v340 = vmul.f32 %v310, %v324
        %v341 = vmul.f32 %v310, %v325
        %343 = vset.pattern.permute.xlu0 0
        %344 = vperm.xlu0 %343, %v288
        %v345 = vpop.permute.xlu0 %344
        %348 = vset.pattern.permute.xlu0 0
        %349 = vperm.xlu0 %348, %v289
        %v350 = vpop.permute.xlu0 %349
        %353 = vset.pattern.permute.xlu0 0
        %354 = vperm.xlu0 %353, %v290
        %v355 = vpop.permute.xlu0 %354
        %358 = vset.pattern.permute.xlu0 0
        %359 = vperm.xlu0 %358, %v291
        %v360 = vpop.permute.xlu0 %359
        %v362 = vadd.f32 %v345, %v326
        %v363 = vadd.f32 %v345, %v327
        %v364 = vadd.f32 %v345, %v328
        %v365 = vadd.f32 %v345, %v329
        %v366 = vadd.f32 %v350, %v330
        %v367 = vadd.f32 %v350, %v331
        %v368 = vadd.f32 %v350, %v332
        %v369 = vadd.f32 %v350, %v333
        %v370 = vadd.f32 %v355, %v334
        %v371 = vadd.f32 %v355, %v335
        %v372 = vadd.f32 %v355, %v336
        %v373 = vadd.f32 %v355, %v337
        %v374 = vadd.f32 %v360, %v338
        %v375 = vadd.f32 %v360, %v339
        %v376 = vadd.f32 %v360, %v340
        %v377 = vadd.f32 %v360, %v341
        %378 = vset.pattern.permute.xlu0 1
        %379 = vperm.xlu0 %378, %v284
        %v380 = vpop.permute.xlu0 %379
        %382 = vset.pattern.permute.xlu0 1
        %383 = vperm.xlu0 %382, %v285
        %v384 = vpop.permute.xlu0 %383
        %386 = vset.pattern.permute.xlu0 1
        %387 = vperm.xlu0 %386, %v286
        %v388 = vpop.permute.xlu0 %387
        %390 = vset.pattern.permute.xlu0 1
        %391 = vperm.xlu0 %390, %v287
        %v392 = vpop.permute.xlu0 %391
        %v394 = vperm.slane %v282, 1
        %v395 = vperm.slane %v282, 5
        %v396 = vperm.slane %v283, 1
        %v397 = vperm.slane %v283, 5
        %v402 = vperm.slane %v394, 1
        %v403 = vperm.slane %v395, 1
        %v404 = vperm.slane %v396, 1
        %v405 = vperm.slane %v397, 1
        %v406 = vmul.f32 %v380, %v402
        %v407 = vmul.f32 %v380, %v403
        %v408 = vmul.f32 %v380, %v404
        %v409 = vmul.f32 %v380, %v405
        %v410 = vmul.f32 %v384, %v402
        %v411 = vmul.f32 %v384, %v403
        %v412 = vmul.f32 %v384, %v404
        %v413 = vmul.f32 %v384, %v405
        %v414 = vmul.f32 %v388, %v402
        %v415 = vmul.f32 %v388, %v403
        %v416 = vmul.f32 %v388, %v404
        %v417 = vmul.f32 %v388, %v405
        %v418 = vmul.f32 %v392, %v402
        %v419 = vmul.f32 %v392, %v403
        %v420 = vmul.f32 %v392, %v404
        %v421 = vmul.f32 %v392, %v405
        %v422 = vadd.f32 %v362, %v406
        %v423 = vadd.f32 %v363, %v407
        %v424 = vadd.f32 %v364, %v408
        %v425 = vadd.f32 %v365, %v409
        %v426 = vadd.f32 %v366, %v410
        %v427 = vadd.f32 %v367, %v411
        %v428 = vadd.f32 %v368, %v412
        %v429 = vadd.f32 %v369, %v413
        %v430 = vadd.f32 %v370, %v414
        %v431 = vadd.f32 %v371, %v415
        %v432 = vadd.f32 %v372, %v416
        %v433 = vadd.f32 %v373, %v417
        %v434 = vadd.f32 %v374, %v418
        %v435 = vadd.f32 %v375, %v419
        %v436 = vadd.f32 %v376, %v420
        %v437 = vadd.f32 %v377, %v421
        %438 = vset.pattern.permute.xlu0 2
        %439 = vperm.xlu0 %438, %v284
        %v440 = vpop.permute.xlu0 %439
        %442 = vset.pattern.permute.xlu0 2
        %443 = vperm.xlu0 %442, %v285
        %v444 = vpop.permute.xlu0 %443
        %446 = vset.pattern.permute.xlu0 2
        %447 = vperm.xlu0 %446, %v286
        %v448 = vpop.permute.xlu0 %447
        %450 = vset.pattern.permute.xlu0 2
        %451 = vperm.xlu0 %450, %v287
        %v452 = vpop.permute.xlu0 %451
        %v454 = vperm.slane %v282, 2
        %v455 = vperm.slane %v282, 6
        %v456 = vperm.slane %v283, 2
        %v457 = vperm.slane %v283, 6
        %v462 = vperm.slane %v454, 2
        %v463 = vperm.slane %v455, 2
        %v464 = vperm.slane %v456, 2
        %v465 = vperm.slane %v457, 2
        %v466 = vmul.f32 %v440, %v462
        %v467 = vmul.f32 %v440, %v463
        %v468 = vmul.f32 %v440, %v464
        %v469 = vmul.f32 %v440, %v465
        %v470 = vmul.f32 %v444, %v462
        %v471 = vmul.f32 %v444, %v463
        %v472 = vmul.f32 %v444, %v464
        %v473 = vmul.f32 %v444, %v465
        %v474 = vmul.f32 %v448, %v462
        %v475 = vmul.f32 %v448, %v463
        %v476 = vmul.f32 %v448, %v464
        %v477 = vmul.f32 %v448, %v465
        %v478 = vmul.f32 %v452, %v462
        %v479 = vmul.f32 %v452, %v463
        %v480 = vmul.f32 %v452, %v464
        %v481 = vmul.f32 %v452, %v465
        %v482 = vadd.f32 %v422, %v466
        %v483 = vadd.f32 %v423, %v467
        %v484 = vadd.f32 %v424, %v468
        %v485 = vadd.f32 %v425, %v469
        %v486 = vadd.f32 %v426, %v470
        %v487 = vadd.f32 %v427, %v471
        %v488 = vadd.f32 %v428, %v472
        %v489 = vadd.f32 %v429, %v473
        %v490 = vadd.f32 %v430, %v474
        %v491 = vadd.f32 %v431, %v475
        %v492 = vadd.f32 %v432, %v476
        %v493 = vadd.f32 %v433, %v477
        %v494 = vadd.f32 %v434, %v478
        %v495 = vadd.f32 %v435, %v479
        %v496 = vadd.f32 %v436, %v480
        %v497 = vadd.f32 %v437, %v481
        %498 = vset.pattern.permute.xlu0 3
        %499 = vperm.xlu0 %498, %v284
        %v500 = vpop.permute.xlu0 %499
        %502 = vset.pattern.permute.xlu0 3
        %503 = vperm.xlu0 %502, %v285
        %v504 = vpop.permute.xlu0 %503
        %506 = vset.pattern.permute.xlu0 3
        %507 = vperm.xlu0 %506, %v286
        %v508 = vpop.permute.xlu0 %507
        %510 = vset.pattern.permute.xlu0 3
        %511 = vperm.xlu0 %510, %v287
        %v512 = vpop.permute.xlu0 %511
        %v514 = vperm.slane %v282, 3
        %v515 = vperm.slane %v282, 7
        %v516 = vperm.slane %v283, 3
        %v517 = vperm.slane %v283, 7
        %v522 = vperm.slane %v514, 3
        %v523 = vperm.slane %v515, 3
        %v524 = vperm.slane %v516, 3
        %v525 = vperm.slane %v517, 3
        %v526 = vmul.f32 %v500, %v522
        %v527 = vmul.f32 %v500, %v523
        %v528 = vmul.f32 %v500, %v524
        %v529 = vmul.f32 %v500, %v525
        %v530 = vmul.f32 %v504, %v522
        %v531 = vmul.f32 %v504, %v523
        %v532 = vmul.f32 %v504, %v524
        %v533 = vmul.f32 %v504, %v525
        %v534 = vmul.f32 %v508, %v522
        %v535 = vmul.f32 %v508, %v523
        %v536 = vmul.f32 %v508, %v524
        %v537 = vmul.f32 %v508, %v525
        %v538 = vmul.f32 %v512, %v522
        %v539 = vmul.f32 %v512, %v523
        %v540 = vmul.f32 %v512, %v524
        %v541 = vmul.f32 %v512, %v525
        %v542 = vadd.f32 %v482, %v526
        %v543 = vadd.f32 %v483, %v527
        %v544 = vadd.f32 %v484, %v528
        %v545 = vadd.f32 %v485, %v529
        %v546 = vadd.f32 %v486, %v530
        %v547 = vadd.f32 %v487, %v531
        %v548 = vadd.f32 %v488, %v532
        %v549 = vadd.f32 %v489, %v533
        %v550 = vadd.f32 %v490, %v534
        %v551 = vadd.f32 %v491, %v535
        %v552 = vadd.f32 %v492, %v536
        %v553 = vadd.f32 %v493, %v537
        %v554 = vadd.f32 %v494, %v538
        %v555 = vadd.f32 %v495, %v539
        %v556 = vadd.f32 %v496, %v540
        %v557 = vadd.f32 %v497, %v541
        %v558 = vmax.f32 %v542, 0.0
        %v559 = vmax.f32 %v543, 0.0
        %v560 = vmax.f32 %v544, 0.0
        %v561 = vmax.f32 %v545, 0.0
        %v562 = vmax.f32 %v546, 0.0
        %v563 = vmax.f32 %v547, 0.0
        %v564 = vmax.f32 %v548, 0.0
        %v565 = vmax.f32 %v549, 0.0
        %v566 = vmax.f32 %v550, 0.0
        %v567 = vmax.f32 %v551, 0.0
        %v568 = vmax.f32 %v552, 0.0
        %v569 = vmax.f32 %v553, 0.0
        %v570 = vmax.f32 %v554, 0.0
        %v571 = vmax.f32 %v555, 0.0
        %v572 = vmax.f32 %v556, 0.0
        %v573 = vmax.f32 %v557, 0.0
        %v574 = vld [vmem:[%s3] sm:$0xff]
        %v575 = vld [vmem:[%s3 + $0x8] sm:$0xff]
        %v576 = vld [vmem:[%s3 + $0x10] sm:$0xff]
        %v577 = vld [vmem:[%s3 + $0x18] sm:$0xff]
        %v578 = vld [vmem:[%s4] sm:$0xff]
        %v579 = vld [vmem:[%s4 + $0x8] sm:$0xff]
        %v580 = vld [vmem:[%s4 + $0x10] sm:$0xff]
        %v581 = vld [vmem:[%s4 + $0x18] sm:$0xff]
        %583 = vset.pattern.permute.xlu0 0
        %584 = vperm.xlu0 %583, %v578
        %v585 = vpop.permute.xlu0 %584
        %588 = vset.pattern.permute.xlu0 0
        %589 = vperm.xlu0 %588, %v579
        %v590 = vpop.permute.xlu0 %589
        %593 = vset.pattern.permute.xlu0 0
        %594 = vperm.xlu0 %593, %v580
        %v595 = vpop.permute.xlu0 %594
        %598 = vset.pattern.permute.xlu0 0
        %599 = vperm.xlu0 %598, %v581
        %v600 = vpop.permute.xlu0 %599
        %vm602 = vcmask 261120
        %v604 = vsel %vm602, %v574, 0
        %v607 = vsel %vm602, %v575, 0
        %v610 = vsel %vm602, %v576, 0
        %v613 = vsel %vm602, %v577, 0
        %615 = vmatpush.msra.mxu0 0.0
        %616 = vmatpush.msra.mxu0 0.0
        %617 = vmatpush.msra.mxu0 0.0
        %618 = vmatpush.msra.mxu0 0.0
        %619 = vmatpush.msra.mxu0 0.0
        %620 = vmatpush.msra.mxu0 0.0
        %621 = vmatpush.msra.mxu0 0.0
        %622 = vmatpush.msra.mxu0 0.0
        %623 = vmatpush.msra.mxu0 0.0
        %624 = vmatpush.msra.mxu0 0.0
        %625 = vmatpush.msra.mxu0 0.0
        %626 = vmatpush.msra.mxu0 0.0
        %627 = vmatpush.msra.mxu0 %v570
        %628 = vmatpush.msra.mxu0 %v566
        %629 = vmatpush.msra.mxu0 %v562
        %630 = vmatpush.msra.mxu0 %v558
        %631 = vmatmul.f32.gmra.mxu0 %v604
        %v632 = vpop.f32.mrf.mxu0
        %v633 = vadd.f32 %v585, %v632
        %634 = vmatmul.f32.gmra.mxu0 %v607
        %v635 = vpop.f32.mrf.mxu0
        %v636 = vadd.f32 %v590, %v635
        %637 = vmatmul.f32.gmra.mxu0 %v610
        %v638 = vpop.f32.mrf.mxu0
        %v639 = vadd.f32 %v595, %v638
        %640 = vmatmul.f32.gmra.mxu0 %v613
        %v641 = vpop.f32.mrf.mxu0
        %v642 = vadd.f32 %v600, %v641
        %643 = vdwg.mxu0
        %644 = vmatpush.msra.mxu0 0.0
        %645 = vmatpush.msra.mxu0 0.0
        %646 = vmatpush.msra.mxu0 0.0
        %647 = vmatpush.msra.mxu0 0.0
        %648 = vmatpush.msra.mxu0 0.0
        %649 = vmatpush.msra.mxu0 0.0
        %650 = vmatpush.msra.mxu0 0.0
        %651 = vmatpush.msra.mxu0 0.0
        %652 = vmatpush.msra.mxu0 0.0
        %653 = vmatpush.msra.mxu0 0.0
        %654 = vmatpush.msra.mxu0 0.0
        %655 = vmatpush.msra.mxu0 0.0
        %656 = vmatpush.msra.mxu0 %v571
        %657 = vmatpush.msra.mxu0 %v567
        %658 = vmatpush.msra.mxu0 %v563
        %659 = vmatpush.msra.mxu0 %v559
        %660 = vmatmul.f32.gmra.mxu0 %v604
        %v661 = vpop.f32.mrf.mxu0
        %v662 = vadd.f32 %v585, %v661
        %663 = vmatmul.f32.gmra.mxu0 %v607
        %v664 = vpop.f32.mrf.mxu0
        %v665 = vadd.f32 %v590, %v664
        %666 = vmatmul.f32.gmra.mxu0 %v610
        %v667 = vpop.f32.mrf.mxu0
        %v668 = vadd.f32 %v595, %v667
        %669 = vmatmul.f32.gmra.mxu0 %v613
        %v670 = vpop.f32.mrf.mxu0
        %v671 = vadd.f32 %v600, %v670
        %672 = vdwg.mxu0
        %673 = vmatpush.msra.mxu0 0.0
        %674 = vmatpush.msra.mxu0 0.0
        %675 = vmatpush.msra.mxu0 0.0
        %676 = vmatpush.msra.mxu0 0.0
        %677 = vmatpush.msra.mxu0 0.0
        %678 = vmatpush.msra.mxu0 0.0
        %679 = vmatpush.msra.mxu0 0.0
        %680 = vmatpush.msra.mxu0 0.0
        %681 = vmatpush.msra.mxu0 0.0
        %682 = vmatpush.msra.mxu0 0.0
        %683 = vmatpush.msra.mxu0 0.0
        %684 = vmatpush.msra.mxu0 0.0
        %685 = vmatpush.msra.mxu0 %v572
        %686 = vmatpush.msra.mxu0 %v568
        %687 = vmatpush.msra.mxu0 %v564
        %688 = vmatpush.msra.mxu0 %v560
        %689 = vmatmul.f32.gmra.mxu0 %v604
        %v690 = vpop.f32.mrf.mxu0
        %v691 = vadd.f32 %v585, %v690
        %692 = vmatmul.f32.gmra.mxu0 %v607
        %v693 = vpop.f32.mrf.mxu0
        %v694 = vadd.f32 %v590, %v693
        %695 = vmatmul.f32.gmra.mxu0 %v610
        %v696 = vpop.f32.mrf.mxu0
        %v697 = vadd.f32 %v595, %v696
        %698 = vmatmul.f32.gmra.mxu0 %v613
        %v699 = vpop.f32.mrf.mxu0
        %v700 = vadd.f32 %v600, %v699
        %701 = vdwg.mxu0
        %702 = vmatpush.msra.mxu0 0.0
        %703 = vmatpush.msra.mxu0 0.0
        %704 = vmatpush.msra.mxu0 0.0
        %705 = vmatpush.msra.mxu0 0.0
        %706 = vmatpush.msra.mxu0 0.0
        %707 = vmatpush.msra.mxu0 0.0
        %708 = vmatpush.msra.mxu0 0.0
        %709 = vmatpush.msra.mxu0 0.0
        %710 = vmatpush.msra.mxu0 0.0
        %711 = vmatpush.msra.mxu0 0.0
        %712 = vmatpush.msra.mxu0 0.0
        %713 = vmatpush.msra.mxu0 0.0
        %714 = vmatpush.msra.mxu0 %v573
        %715 = vmatpush.msra.mxu0 %v569
        %716 = vmatpush.msra.mxu0 %v565
        %717 = vmatpush.msra.mxu0 %v561
        %718 = vmatmul.f32.gmra.mxu0 %v604
        %v719 = vpop.f32.mrf.mxu0
        %v720 = vadd.f32 %v585, %v719
        %721 = vmatmul.f32.gmra.mxu0 %v607
        %v722 = vpop.f32.mrf.mxu0
        %v723 = vadd.f32 %v590, %v722
        %724 = vmatmul.f32.gmra.mxu0 %v610
        %v725 = vpop.f32.mrf.mxu0
        %v726 = vadd.f32 %v595, %v725
        %727 = vmatmul.f32.gmra.mxu0 %v613
        %v728 = vpop.f32.mrf.mxu0
        %v729 = vadd.f32 %v600, %v728
        %730 = vdwg.mxu0
        %v731 = vmax.f32 %v633, 0.0
        %v732 = vmax.f32 %v662, 0.0
        %v733 = vmax.f32 %v691, 0.0
        %v734 = vmax.f32 %v720, 0.0
        %v735 = vmax.f32 %v636, 0.0
        %v736 = vmax.f32 %v665, 0.0
        %v737 = vmax.f32 %v694, 0.0
        %v738 = vmax.f32 %v723, 0.0
        %v739 = vmax.f32 %v639, 0.0
        %v740 = vmax.f32 %v668, 0.0
        %v741 = vmax.f32 %v697, 0.0
        %v742 = vmax.f32 %v726, 0.0
        %v743 = vmax.f32 %v642, 0.0
        %v744 = vmax.f32 %v671, 0.0
        %v745 = vmax.f32 %v700, 0.0
        %v746 = vmax.f32 %v729, 0.0
        %v747 = vld [vmem:[%s5] sm:$0x1]
        %v748 = vld [vmem:[#allocation2] sm:$0x1]
        %750 = vset.pattern.permute.xlu0 0
        %751 = vperm.xlu0 %750, %v748
        %v752 = vpop.permute.xlu0 %751
        %v754 = vperm.slane %v752, 0
        %v756 = vsel %vm602, %v747, 0
        %758 = vmatpush.msra.mxu0 0.0
        %759 = vmatpush.msra.mxu0 0.0
        %760 = vmatpush.msra.mxu0 0.0
        %761 = vmatpush.msra.mxu0 0.0
        %762 = vmatpush.msra.mxu0 0.0
        %763 = vmatpush.msra.mxu0 0.0
        %764 = vmatpush.msra.mxu0 0.0
        %765 = vmatpush.msra.mxu0 0.0
        %766 = vmatpush.msra.mxu0 0.0
        %767 = vmatpush.msra.mxu0 0.0
        %768 = vmatpush.msra.mxu0 0.0
        %769 = vmatpush.msra.mxu0 0.0
        %770 = vmatpush.msra.mxu0 %v743
        %771 = vmatpush.msra.mxu0 %v739
        %772 = vmatpush.msra.mxu0 %v735
        %773 = vmatpush.msra.mxu0 %v731
        %774 = vmatmul.f32.gmra.mxu0 %v756
        %v775 = vpop.f32.mrf.mxu0
        %v776 = vadd.f32 %v754, %v775
        %777 = vdwg.mxu0
        %778 = vmatpush.msra.mxu0 0.0
        %779 = vmatpush.msra.mxu0 0.0
        %780 = vmatpush.msra.mxu0 0.0
        %781 = vmatpush.msra.mxu0 0.0
        %782 = vmatpush.msra.mxu0 0.0
        %783 = vmatpush.msra.mxu0 0.0
        %784 = vmatpush.msra.mxu0 0.0
        %785 = vmatpush.msra.mxu0 0.0
        %786 = vmatpush.msra.mxu0 0.0
        %787 = vmatpush.msra.mxu0 0.0
        %788 = vmatpush.msra.mxu0 0.0
        %789 = vmatpush.msra.mxu0 0.0
        %790 = vmatpush.msra.mxu0 %v744
        %791 = vmatpush.msra.mxu0 %v740
        %792 = vmatpush.msra.mxu0 %v736
        %793 = vmatpush.msra.mxu0 %v732
        %794 = vmatmul.f32.gmra.mxu0 %v756
        %v795 = vpop.f32.mrf.mxu0
        %v796 = vadd.f32 %v754, %v795
        %797 = vdwg.mxu0
        %798 = vmatpush.msra.mxu0 0.0
        %799 = vmatpush.msra.mxu0 0.0
        %800 = vmatpush.msra.mxu0 0.0
        %801 = vmatpush.msra.mxu0 0.0
        %802 = vmatpush.msra.mxu0 0.0
        %803 = vmatpush.msra.mxu0 0.0
        %804 = vmatpush.msra.mxu0 0.0
        %805 = vmatpush.msra.mxu0 0.0
        %806 = vmatpush.msra.mxu0 0.0
        %807 = vmatpush.msra.mxu0 0.0
        %808 = vmatpush.msra.mxu0 0.0
        %809 = vmatpush.msra.mxu0 0.0
        %810 = vmatpush.msra.mxu0 %v745
        %811 = vmatpush.msra.mxu0 %v741
        %812 = vmatpush.msra.mxu0 %v737
        %813 = vmatpush.msra.mxu0 %v733
        %814 = vmatmul.f32.gmra.mxu0 %v756
        %v815 = vpop.f32.mrf.mxu0
        %v816 = vadd.f32 %v754, %v815
        %817 = vdwg.mxu0
        %818 = vmatpush.msra.mxu0 0.0
        %819 = vmatpush.msra.mxu0 0.0
        %820 = vmatpush.msra.mxu0 0.0
        %821 = vmatpush.msra.mxu0 0.0
        %822 = vmatpush.msra.mxu0 0.0
        %823 = vmatpush.msra.mxu0 0.0
        %824 = vmatpush.msra.mxu0 0.0
        %825 = vmatpush.msra.mxu0 0.0
        %826 = vmatpush.msra.mxu0 0.0
        %827 = vmatpush.msra.mxu0 0.0
        %828 = vmatpush.msra.mxu0 0.0
        %829 = vmatpush.msra.mxu0 0.0
        %830 = vmatpush.msra.mxu0 %v746
        %831 = vmatpush.msra.mxu0 %v742
        %832 = vmatpush.msra.mxu0 %v738
        %833 = vmatpush.msra.mxu0 %v734
        %834 = vmatmul.f32.gmra.mxu0 %v756
        %v835 = vpop.f32.mrf.mxu0
        %v836 = vadd.f32 %v754, %v835
        %837 = vdwg.mxu0
        %v842 = vrot.slane %v796, 7
        %v843 = vrot.slane %v816, 6
        %v844 = vrot.slane %v836, 5
        %vm845 = vcmask 1040384
        %v846 = vsel %vm845, %v776, %v842
        %vm847 = vcmask 1042434
        %v848 = vsel %vm847, %v843, %v844
        %vm849 = vcmask 1041408
        %v850 = vsel %vm849, %v846, %v848
        %v852 = vlaneseq
        %vm853 = vcmp.ge.s32.totalorder %v852, 0
        %vm854 = vcmp.lt.s32.totalorder %v852, 512
        %vm855 = vmand %vm853, %vm854
        %856 = vst.msk [vmem:[%s274] sm:$0xf] %vm855, %v850
        %s857 = sand.u32 %s183, 1
        %s858 = scalar_lea.sflag [#allocation4], %s857
        %s859 = sand.u32 %s183, 1
        %s860 = smul.addr %s859, 4
        %s861 = scalar_lea.vmem [#allocation3], %s860
        // Predicated region
        $region49: #{tpu_custom_call.1} parent=47 // pred_check
          %p862 = pneg %p193
        $region50: #{tpu_custom_call.1} parent=47 // pred_check_branch
          %864 = sbr.rel (%p862) target = $region52
        $region51: #{tpu_custom_call.1} parent=47 // pred_region
          %s865 = smul.u32 4, %s23
          %867 = vsyncadd %s858, 0
          %s868 = scalar_lea.hbm %s7, %s865
          %s870 = sshll.u32 %s861, 4
          %s871 = int_to_ptr.vmem [resolvable:$true] %s870
          %s872 = sshll.u32 %s868, 4
          %s873 = int_to_ptr.hbm [resolvable:$true] %s872
          %875 = dma.vmem_to_hbm [thread:$0]  %s871, 64, %s873, %s858
        $region52: #{tpu_custom_call.1} parent=47 // pred_fallthru
          _
      $region48: #{tpu_custom_call.1} parent=5 // pred_fallthru
        _
      %p876 = scmp.le.s32.totalorder 2, %s18
      // Predicated region
      $region53: #{tpu_custom_call.1} parent=5 // pred_check
        %p877 = pneg %p876
      $region54: #{tpu_custom_call.1} parent=5 // pred_check_branch
        %879 = sbr.rel (%p877) target = $region56
      $region55: #{tpu_custom_call.1} parent=5 // pred_region
        %s880 = ssub.s32 %s18, 2
        // Predicated region
        $region57: #{tpu_custom_call.1} parent=55 // pred_check
          %p881 = pneg %p199
        $region58: #{tpu_custom_call.1} parent=55 // pred_check_branch
          %883 = sbr.rel (%p881) target = $region60
        $region59: #{tpu_custom_call.1} parent=55 // pred_region
          %s884 = sand.u32 %s184, 1
          %s885 = scalar_lea.sflag [#allocation4], %s884
          %s886 = sand.u32 %s184, 1
          %s887 = smul.addr %s886, 4
          %s888 = scalar_lea.vmem [#allocation3], %s887
          %890 = dma.done %s885, 64
        $region60: #{tpu_custom_call.1} parent=55 // pred_fallthru
          _
      $region56: #{tpu_custom_call.1} parent=5 // pred_fallthru
        _
    $region6: #{tpu_custom_call.1} parent=1 // loop_footer
      %s22 = sadd.s32 1, %s18
    $region7: #{tpu_custom_call.1} parent=1 // loop_footer_branch
      %17 = sbr.rel target = $region3
    $region8: #{tpu_custom_call.1} parent=1 // loop_exit
      _
    %891 = vsyncpa [#allocation4], 1
    %s892 = scalar_lea.sflag [#allocation4], 1
    %893 = vsyncpa %s892, 1

</llo_original>
